<compile_context>
chip_gen: v5e
topology: v5e:2x2
jax: 0.10.0
libtpu: 0.0.40
codegen_flags: <defaults>
</compile_context>

<pallas_src>
import jax
import jax.numpy as jnp
from jax.experimental import pallas as pl
from jax.experimental.pallas import tpu as pltpu

_LANE = 128
_SUBLANE = 8


def _round_up(a, b):
    return (a + b - 1) // b * b


def _sector_kernel(z_ref, c_ref, o_ref):
    # z_ref: (2, TILE_R, 128), c_ref: (4, TILE_R, 128), o_ref: (2, TILE_R, 128).
    # Channels are indexed on the leading axis; samples fill full
    # (TILE_R, 128) sublane x lane tiles -> fully packed vregs, unmasked vst.
    z0 = z_ref[0].astype(jnp.float32)
    z1 = z_ref[1].astype(jnp.float32)
    x = c_ref[0].astype(jnp.float32)
    y = c_ref[1].astype(jnp.float32)
    r = c_ref[2].astype(jnp.float32)
    psi = c_ref[3].astype(jnp.float32)

    # Exact tanh algebra for sigmoid (single EUP op each, no approx recip):
    #   sigmoid(z) - 0.5 = 0.5 * tanh(z / 2)
    #   sigmoid(z)       = 0.5 * (1 + tanh(z / 2))
    t0 = jnp.tanh(0.5 * z0)
    t1 = jnp.tanh(0.5 * z1)

    radius = r * (0.5 * (1.0 + t1))          # == R * sigmoid(z[:, 1])
    phi = (0.5 * psi) * t0                   # == PSI * (sigmoid(z[:, 0]) - 0.5)

    o_ref[0] = (radius * jnp.sin(phi) + x).astype(o_ref.dtype)
    o_ref[1] = (radius * jnp.cos(phi) + y).astype(o_ref.dtype)


def _reference(z, constr_para):
    """Pure-jnp forward with identical semantics (also the small-N fast path)."""
    z32 = z.astype(jnp.float32)
    c = constr_para.astype(jnp.float32)
    p = jax.nn.sigmoid(z32)
    radius = c[:, 2] * p[:, 1]
    phi = c[:, 3] * (p[:, 0] - 0.5)
    return jnp.stack([radius * jnp.sin(phi) + c[:, 0],
                      radius * jnp.cos(phi) + c[:, 1]], axis=1)


def sectors_of_a_circle(z, constr_para, *, max_tile_r=2048, small_n_fallback=1024):
    """Pallas TPU implementation of SectorsOfACircle.forward.

    Args:
        z:                (N, 2) float array (intermediate variable).
        constr_para:      (N, 4) float array, columns ordered (x, y, R, PSI).
        max_tile_r:       max sublane rows per grid step (multiple of 8);
                          per-step VMEM = 4 KiB * tile_r (x2 for double buffer).
        small_n_fallback: below this N, skip pallas_call (launch + layout
                          plumbing dominate) and use the pure-jnp path.
    Returns:
        (N, 2) float32 array: points constrained to lie in the circle sector.
    """
    N = z.shape[0]
    assert z.shape == (N, 2) and constr_para.shape == (N, 4)

    if N == 0:
        return jnp.zeros((0, 2), jnp.float32)
    if N <= small_n_fallback:
        return _reference(z, constr_para)

    rows = pl.cdiv(N, _LANE)                       # rows of 128 samples each
    # Cap tile so the grid has >= 2 steps when possible (v7x megacore sharding),
    # keep tile rows a multiple of 8 (f32 (8,128) tiling), bound by max_tile_r.
    tile_r = min(max_tile_r, _round_up(max(pl.cdiv(rows, 2), 1), _SUBLANE))
    rows_pad = _round_up(rows, tile_r)
    n_pad = rows_pad * _LANE
    grid = (rows_pad // tile_r,)

    # Wrapper-side layout plumbing: deinterleave to per-channel slabs that are
    # lane-dense (samples on the 128-lane axis) AND sublane-dense (8 rows per
    # vreg).  pad + transpose + reshape fuse into a single XLA copy; zero
    # padding is benign (finite math) and sliced away at the end.
    zt = jnp.pad(z, ((0, n_pad - N), (0, 0))).T.reshape(2, rows_pad, _LANE)
    ct = jnp.pad(constr_para, ((0, n_pad - N), (0, 0))).T.reshape(4, rows_pad, _LANE)

    out_t = pl.pallas_call(
        _sector_kernel,
        out_shape=jax.ShapeDtypeStruct((2, rows_pad, _LANE), jnp.float32),
        grid=grid,
        in_specs=[
            pl.BlockSpec((2, tile_r, _LANE), lambda i: (0, i, 0)),
            pl.BlockSpec((4, tile_r, _LANE), lambda i: (0, i, 0)),
        ],
        out_specs=pl.BlockSpec((2, tile_r, _LANE), lambda i: (0, i, 0)),
        compiler_params=pltpu.CompilerParams(
            dimension_semantics=("parallel",),
            vmem_limit_bytes=32 * 1024 * 1024,
        ),
    )(zt, ct)

    return out_t.reshape(2, n_pad)[:, :N].T        # (N, 2)


def _make_inputs(key, n):
    k_z, k_xy, k_r, k_psi = jax.random.split(key, 4)
    z = jax.random.normal(k_z, (n, 2), dtype=jnp.float32)
    center = jax.random.normal(k_xy, (n, 2), dtype=jnp.float32) * 2.0
    radius = jax.random.uniform(k_r, (n, 1), dtype=jnp.float32,
                                minval=0.5, maxval=3.0)
    psi = jax.random.uniform(k_psi, (n, 1), dtype=jnp.float32,
                             minval=0.1, maxval=2.0 * jnp.pi)
    constr_para = jnp.concatenate([center, radius, psi], axis=1)  # (n, 4)
    return z, constr_para


if __name__ == "__main__":
    key = jax.random.PRNGKey(0)
    k_small, k_mid, k_big = jax.random.split(key, 3)

    # tanh-based sigmoid is exact, so the tolerance is tight; formula / column
    # order errors would be O(1).
    TOL = 1e-4

    # Small case at the module's intended (N, 2)/(N, 4) usage, forcing the
    # Pallas path (fast path disabled) so the kernel itself is exercised.
    N = 8
    z, constr_para = _make_inputs(k_small, N)
    out = jax.block_until_ready(
        sectors_of_a_circle(z, constr_para, small_n_fallback=0))
    ref = _reference(z, constr_para)
    assert out.shape == (N, 2) and out.dtype == jnp.float32
    assert jnp.allclose(out, ref, atol=TOL, rtol=TOL)

    # Non-128-aligned case through the Pallas path (padding exercised).
    N2 = 700
    z2, constr_para2 = _make_inputs(k_mid, N2)
    out2 = jax.block_until_ready(
        sectors_of_a_circle(z2, constr_para2, small_n_fallback=0))
    ref2 = _reference(z2, constr_para2)
    assert out2.shape == (N2, 2) and out2.dtype == jnp.float32
    assert jnp.allclose(out2, ref2, atol=TOL, rtol=TOL)

    # Mid-size case with default settings: above the fast-path threshold, with
    # enough rows that the grid splits into >= 2 steps (v7x megacore path).
    N3 = 2000
    z3, constr_para3 = _make_inputs(k_big, N3)
    out3 = jax.block_until_ready(sectors_of_a_circle(z3, constr_para3))
    ref3 = _reference(z3, constr_para3)
    assert out3.shape == (N3, 2) and out3.dtype == jnp.float32
    assert jnp.allclose(out3, ref3, atol=TOL, rtol=TOL)

    # Small-N fast path with defaults (pure jnp, identical semantics).
    out_fp = jax.block_until_ready(sectors_of_a_circle(z, constr_para))
    assert out_fp.shape == (N, 2)
    assert jnp.allclose(out_fp, ref, atol=TOL, rtol=TOL)

    print("KERNEL_OK")
</pallas_src>

<mosaic_0001>
module attributes {stable_mosaic.version = 11 : i64} {
  func.func @_sector_kernel(%arg0: i32, %arg1: memref<2x8x128xf32, #tpu.memory_space<vmem>>, %arg2: memref<4x8x128xf32, #tpu.memory_space<vmem>>, %arg3: memref<2x8x128xf32, #tpu.memory_space<vmem>>) attributes {dimension_semantics = [#tpu.dimension_semantics<parallel>], iteration_bounds = array<i64: 1>, scalar_prefetch = 0 : i64, scratch_operands = 0 : i64, tpu.core_type = #tpu.core_type<tc>, window_params = [{transform_indices = @transform_0, window_bounds = array<i64: 2, 8, 128>}, {transform_indices = @transform_1, window_bounds = array<i64: 4, 8, 128>}, {transform_indices = @transform_2, window_bounds = array<i64: 2, 8, 128>}]} {
    %c0 = arith.constant 0 : index
    %c0_0 = arith.constant 0 : index
    %c0_1 = arith.constant 0 : index
    %0 = vector.load %arg1[%c0, %c0_0, %c0_1] : memref<2x8x128xf32, #tpu.memory_space<vmem>>, vector<1x8x128xf32>
    %1 = vector.shape_cast %0 : vector<1x8x128xf32> to vector<8x128xf32>
    %c1 = arith.constant 1 : index
    %c0_2 = arith.constant 0 : index
    %c0_3 = arith.constant 0 : index
    %2 = vector.load %arg1[%c1, %c0_2, %c0_3] : memref<2x8x128xf32, #tpu.memory_space<vmem>>, vector<1x8x128xf32>
    %3 = vector.shape_cast %2 : vector<1x8x128xf32> to vector<8x128xf32>
    %c0_4 = arith.constant 0 : index
    %c0_5 = arith.constant 0 : index
    %c0_6 = arith.constant 0 : index
    %4 = vector.load %arg2[%c0_4, %c0_5, %c0_6] : memref<4x8x128xf32, #tpu.memory_space<vmem>>, vector<1x8x128xf32>
    %5 = vector.shape_cast %4 : vector<1x8x128xf32> to vector<8x128xf32>
    %c1_7 = arith.constant 1 : index
    %c0_8 = arith.constant 0 : index
    %c0_9 = arith.constant 0 : index
    %6 = vector.load %arg2[%c1_7, %c0_8, %c0_9] : memref<4x8x128xf32, #tpu.memory_space<vmem>>, vector<1x8x128xf32>
    %7 = vector.shape_cast %6 : vector<1x8x128xf32> to vector<8x128xf32>
    %c2 = arith.constant 2 : index
    %c0_10 = arith.constant 0 : index
    %c0_11 = arith.constant 0 : index
    %8 = vector.load %arg2[%c2, %c0_10, %c0_11] : memref<4x8x128xf32, #tpu.memory_space<vmem>>, vector<1x8x128xf32>
    %9 = vector.shape_cast %8 : vector<1x8x128xf32> to vector<8x128xf32>
    %c3 = arith.constant 3 : index
    %c0_12 = arith.constant 0 : index
    %c0_13 = arith.constant 0 : index
    %10 = vector.load %arg2[%c3, %c0_12, %c0_13] : memref<4x8x128xf32, #tpu.memory_space<vmem>>, vector<1x8x128xf32>
    %11 = vector.shape_cast %10 : vector<1x8x128xf32> to vector<8x128xf32>
    %cst = arith.constant 5.000000e-01 : f32
    %12 = vector.broadcast %cst : f32 to vector<8x128xf32>
    %13 = arith.mulf %12, %1 : vector<8x128xf32>
    %14 = math.tanh %13 : vector<8x128xf32>
    %cst_14 = arith.constant 5.000000e-01 : f32
    %15 = vector.broadcast %cst_14 : f32 to vector<8x128xf32>
    %16 = arith.mulf %15, %3 : vector<8x128xf32>
    %17 = math.tanh %16 : vector<8x128xf32>
    %cst_15 = arith.constant 1.000000e+00 : f32
    %18 = vector.broadcast %cst_15 : f32 to vector<8x128xf32>
    %19 = arith.addf %18, %17 : vector<8x128xf32>
    %cst_16 = arith.constant 5.000000e-01 : f32
    %20 = vector.broadcast %cst_16 : f32 to vector<8x128xf32>
    %21 = arith.mulf %20, %19 : vector<8x128xf32>
    %22 = arith.mulf %9, %21 : vector<8x128xf32>
    %cst_17 = arith.constant 5.000000e-01 : f32
    %23 = vector.broadcast %cst_17 : f32 to vector<8x128xf32>
    %24 = arith.mulf %23, %11 : vector<8x128xf32>
    %25 = arith.mulf %24, %14 : vector<8x128xf32>
    %26 = math.sin %25 : vector<8x128xf32>
    %27 = arith.mulf %22, %26 : vector<8x128xf32>
    %28 = arith.addf %27, %5 : vector<8x128xf32>
    %c0_18 = arith.constant 0 : index
    %c0_19 = arith.constant 0 : index
    %c0_20 = arith.constant 0 : index
    %29 = vector.load %arg3[%c0_18, %c0_19, %c0_20] : memref<2x8x128xf32, #tpu.memory_space<vmem>>, vector<1x8x128xf32>
    %30 = vector.shape_cast %29 : vector<1x8x128xf32> to vector<8x128xf32>
    %31 = vector.shape_cast %28 : vector<8x128xf32> to vector<1x8x128xf32>
    tpu.vector_store %arg3[%c0_18, %c0_19, %c0_20], %31 {strides = array<i32>} : memref<2x8x128xf32, #tpu.memory_space<vmem>>, vector<1x8x128xf32>,
    %32 = math.cos %25 : vector<8x128xf32>
    %33 = arith.mulf %22, %32 : vector<8x128xf32>
    %34 = arith.addf %33, %7 : vector<8x128xf32>
    %c1_21 = arith.constant 1 : index
    %c0_22 = arith.constant 0 : index
    %c0_23 = arith.constant 0 : index
    %35 = vector.load %arg3[%c1_21, %c0_22, %c0_23] : memref<2x8x128xf32, #tpu.memory_space<vmem>>, vector<1x8x128xf32>
    %36 = vector.shape_cast %35 : vector<1x8x128xf32> to vector<8x128xf32>
    %37 = vector.shape_cast %34 : vector<8x128xf32> to vector<1x8x128xf32>
    tpu.vector_store %arg3[%c1_21, %c0_22, %c0_23], %37 {strides = array<i32>} : memref<2x8x128xf32, #tpu.memory_space<vmem>>, vector<1x8x128xf32>,
    return
  }
  func.func @transform_0(%arg0: i32) -> (i32, i32, i32) {
    %c0_i32 = arith.constant 0 : i32
    %c0_i32_0 = arith.constant 0 : i32
    %c0_i32_1 = arith.constant 0 : i32
    return %c0_i32, %arg0, %c0_i32_0 : i32, i32, i32
  }
  func.func @transform_1(%arg0: i32) -> (i32, i32, i32) {
    %c0_i32 = arith.constant 0 : i32
    %c0_i32_0 = arith.constant 0 : i32
    %c0_i32_1 = arith.constant 0 : i32
    return %c0_i32, %arg0, %c0_i32_0 : i32, i32, i32
  }
  func.func @transform_2(%arg0: i32) -> (i32, i32, i32) {
    %c0_i32 = arith.constant 0 : i32
    %c0_i32_0 = arith.constant 0 : i32
    %c0_i32_1 = arith.constant 0 : i32
    return %c0_i32, %arg0, %c0_i32_0 : i32, i32, i32
  }
}

</mosaic_0001>

<llo_original>
// kernel: tpu_custom_call.1
$region0: #{tpu_custom_call.1}
  #allocation0 [shape = 'u32[]', space=smem, size = 0x4, offset = 0x4, fixed_abs, tag = 'smem constant byte address 0x4 - core index']
  #allocation1 [shape = 'u32[72,128]{1,0:T(1,128)}', space=vmem, size = 0x9000, scoped, tag = 'internal scratch']
  %s0 = inlined_call_operand.hbm [shape: f32[2,8,128], index: 0, kind: input, shape index: {}]
  %s1 = inlined_call_operand.hbm [shape: f32[4,8,128], index: 1, kind: input, shape index: {}]
  %s2 = inlined_call_operand.hbm [shape: f32[2,8,128], index: 2, kind: output, shape index: {}]
  %s3 = sld [smem:[#allocation0]]
  $region26: #{tpu_custom_call.1} parent=0
    _
  %s5 = ssub.s32 1, %s3
  %s6 = scalar_select 0, %s5, %s3
  $region1: #{tpu_custom_call.1} parent=0
    #allocation2 [shape = 'u8[8192]{0}', space=vmem, size = 0x2000, scoped, tag = 'input window, operand 0, single buffered']
    #allocation3 [shape = 's32[1]{0}', space=sflag, size = 0x4, scoped, tag = 'scoped memory for tpu_custom_call.1']
    #allocation4 [shape = 's32[1]{0}', space=sflag, size = 0x4, scoped, tag = 'scoped memory for tpu_custom_call.1']
    #allocation5 [shape = 'u8[16384]{0}', space=vmem, size = 0x4000, scoped, tag = 'input window, operand 1, single buffered']
    #allocation6 [shape = 's32[1]{0}', space=sflag, size = 0x4, scoped, tag = 'scoped memory for tpu_custom_call.1']
    #allocation7 [shape = 'u8[8192]{0}', space=vmem, size = 0x2000, scoped, tag = 'output window, operand 0, single buffered']
    %7 = vsyncpa [#allocation3], 0
    %8 = vsyncpa [#allocation6], 0
    %9 = vsyncpa [#allocation4], 0
    // Predicated region
    $region2: #{tpu_custom_call.1} parent=1 // pred_check
      _
    $region3: #{tpu_custom_call.1} parent=1 // pred_check_branch
      %11 = sbr.rel (0) target = $region5
    $region4: #{tpu_custom_call.1} parent=1 // pred_region
      %13 = vsyncadd [#allocation3], 0
      %s14 = sshll.u32 %s0, 4
      %s15 = int_to_ptr.hbm [resolvable:$true] %s14
      %s16 = sshll.u32 [#allocation2], 4
      %s17 = int_to_ptr.vmem [resolvable:$true] %s16
      %22 = dma.hbm_to_vmem [thread:$0]  %s15, 256, %s17, [#allocation3], 128, 128, 8
    $region5: #{tpu_custom_call.1} parent=1 // pred_fallthru
      _
    // Predicated region
    $region6: #{tpu_custom_call.1} parent=1 // pred_check
      _
    $region7: #{tpu_custom_call.1} parent=1 // pred_check_branch
      %24 = sbr.rel (0) target = $region9
    $region8: #{tpu_custom_call.1} parent=1 // pred_region
      %26 = vsyncadd [#allocation6], 0
      %s27 = sshll.u32 %s1, 4
      %s28 = int_to_ptr.hbm [resolvable:$true] %s27
      %s29 = sshll.u32 [#allocation5], 4
      %s30 = int_to_ptr.vmem [resolvable:$true] %s29
      %35 = dma.hbm_to_vmem [thread:$0]  %s28, 512, %s30, [#allocation6], 128, 128, 8
    $region9: #{tpu_custom_call.1} parent=1 // pred_fallthru
      _
    // Predicated region
    $region10: #{tpu_custom_call.1} parent=1 // pred_check
      _
    $region11: #{tpu_custom_call.1} parent=1 // pred_check_branch
      %37 = sbr.rel (0) target = $region13
    $region12: #{tpu_custom_call.1} parent=1 // pred_region
      %39 = dma.done [#allocation3], 256
    $region13: #{tpu_custom_call.1} parent=1 // pred_fallthru
      _
    // Predicated region
    $region14: #{tpu_custom_call.1} parent=1 // pred_check
      _
    $region15: #{tpu_custom_call.1} parent=1 // pred_check_branch
      %41 = sbr.rel (0) target = $region17
    $region16: #{tpu_custom_call.1} parent=1 // pred_region
      %43 = dma.done [#allocation6], 512
    $region17: #{tpu_custom_call.1} parent=1 // pred_fallthru
      _
    %v44 = vld [vmem:[#allocation2] sm:$0xff]
    %s45 = scalar_lea.vmem [#allocation2], 8
    %v46 = vld [vmem:[%s45] sm:$0xff]
    %v47 = vld [vmem:[#allocation5] sm:$0xff]
    %s48 = scalar_lea.vmem [#allocation5], 8
    %v49 = vld [vmem:[%s48] sm:$0xff]
    %s50 = scalar_lea.vmem [#allocation5], 16
    %v51 = vld [vmem:[%s50] sm:$0xff]
    %s52 = scalar_lea.vmem [#allocation5], 24
    %v53 = vld [vmem:[%s52] sm:$0xff]
    %v54 = vmul.f32 %v44, 0.5
    %v55 = vtanh.pop %v54
    %v56 = vmul.f32 %v46, 0.5
    %v57 = vtanh.pop %v56
    %v58 = vadd.f32 %v57, 1.0
    %v59 = vmul.f32 %v58, 0.5
    %v60 = vmul.f32 %v51, %v59
    %v61 = vmul.f32 %v53, 0.5
    %v62 = vmul.f32 %v61, %v55
    %v63 = vand.u32 2147483647, %v62
    %vm64 = vcmp.le.f32.partialorder %v63, 0.7853982
    %vm65 = vcmp.lt.s32.totalorder %v62, 0
    %v66 = vand.u32 %v62, 2139095040
    %v67 = vshrl.u32 %v66, 23
    %v68 = vsub.s32 %v67, 127
    %v69 = vand.u32 2147483647, %v62
    %v70 = vand.u32 %v69, 8388607
    %v71 = vor.u32 %v70, 8388608
    %v72 = vsub.s32 0, %v71
    %v73 = vadd.s32 %v68, 1
    %vm74 = vcmp.gt.s32.totalorder %v73, 0
    %v75 = vsel %vm74, %v73, 0
    %v76 = vshrl.u32 %v75, 5
    %v77 = vand.u32 %v75, 31
    %v78 = vsub.s32 32, %v77
    %v79 = vshrl.u32 683565275, %v78
    %v80 = vshll.u32 683565275, %v77
    %v81 = vshrl.u32 2475754826, %v78
    %v82 = vor.u32 %v80, %v81
    %v83 = vshll.u32 2475754826, %v77
    %v84 = vshrl.u32 2131351028, %v78
    %v85 = vor.u32 %v83, %v84
    %v86 = vshll.u32 2131351028, %v77
    %v87 = vshrl.u32 2102212464, %v78
    %v88 = vor.u32 %v86, %v87
    %v89 = vshll.u32 2102212464, %v77
    %v90 = vshrl.u32 920167782, %v78
    %v91 = vor.u32 %v89, %v90
    %v92 = vshll.u32 920167782, %v77
    %v93 = vshrl.u32 1326507024, %v78
    %v94 = vor.u32 %v92, %v93
    %vm95 = vcmp.lt.s32.totalorder %v76, 1
    %vm96 = vcmp.lt.s32.totalorder %v76, 2
    %vm97 = vcmp.lt.s32.totalorder %v76, 3
    %vm98 = vcmp.lt.s32.totalorder %v76, 4
    %v99 = vsel %vm95, %v79, %v82
    %v100 = vsel %vm98, %v88, 2102212464
    %v101 = vsel %vm97, %v85, %v100
    %v102 = vsel %vm96, %v99, %v101
    %v103 = vsel %vm95, %v82, %v85
    %v104 = vsel %vm98, %v91, 920167782
    %v105 = vsel %vm97, %v88, %v104
    %v106 = vsel %vm96, %v103, %v105
    %v107 = vsel %vm95, %v85, %v88
    %v108 = vsel %vm98, %v94, 1326507024
    %v109 = vsel %vm97, %v91, %v108
    %v110 = vsel %vm96, %v107, %v109
    %v111 = vshll.u32 %v71, 8
    %v112 = vand.u32 %v111, 65535
    %v113 = vshrl.u32 %v111, 16
    %v114 = vand.u32 %v110, 65535
    %v115 = vshrl.u32 %v110, 16
    %v116 = vmul.u32 %v112, %v114
    %v117 = vmul.u32 %v112, %v115
    %v118 = vmul.u32 %v113, %v114
    %v119 = vmul.u32 %v113, %v115
    %v120 = vshll.u32 %v117, 16
    %v121 = vshrl.u32 %v117, 16
    %v122 = vshll.u32 %v118, 16
    %v123 = vshrl.u32 %v118, 16
    %vm124 = vc.u32 %v116, %v120
    %v125 = vsel %vm124, 1, 0
    %v126 = vadd.s32 %v116, %v120
    %v127 = vadd.s32 %v119, %v125
    %vm128 = vc.u32 %v126, %v122
    %v129 = vsel %vm128, 1, 0
    %v130 = vadd.s32 %v126, %v122
    %v131 = vadd.s32 %v127, %v129
    %v132 = vadd.s32 %v131, %v121
    %v133 = vadd.s32 %v132, %v123
    %v134 = vand.u32 %v111, 65535
    %v135 = vshrl.u32 %v111, 16
    %v136 = vand.u32 %v106, 65535
    %v137 = vshrl.u32 %v106, 16
    %v138 = vmul.u32 %v134, %v136
    %v139 = vmul.u32 %v134, %v137
    %v140 = vmul.u32 %v135, %v136
    %v141 = vmul.u32 %v135, %v137
    %v142 = vshll.u32 %v139, 16
    %v143 = vshrl.u32 %v139, 16
    %v144 = vshll.u32 %v140, 16
    %v145 = vshrl.u32 %v140, 16
    %vm146 = vc.u32 %v138, %v142
    %v147 = vsel %vm146, 1, 0
    %v148 = vadd.s32 %v138, %v142
    %v149 = vadd.s32 %v141, %v147
    %vm150 = vc.u32 %v148, %v144
    %v151 = vsel %vm150, 1, 0
    %v152 = vadd.s32 %v148, %v144
    %v153 = vadd.s32 %v149, %v151
    %v154 = vadd.s32 %v153, %v143
    %v155 = vadd.s32 %v154, %v145
    %v156 = vmul.u32 %v111, %v102
    %v157 = vadd.s32 %v133, %v152
    %vm158 = vc.u32 %v133, %v152
    %v159 = vadd.s32 %v155, 1
    %v160 = vsel %vm158, %v159, %v155
    %v161 = vadd.s32 %v156, %v160
    %v162 = vadd.s32 %v161, 536870912
    %v163 = vshrl.u32 %v162, 30
    %v164 = vshll.u32 %v163, 30
    %v165 = vsub.s32 %v161, %v164
    %vm166 = vcmp.lt.s32.totalorder %v165, 0
    %v167 = vsub.s32 0, %v165
    %v168 = vsel %vm166, %v167, %v165
    %v169 = vclz %v168
    %v170 = vsub.s32 %v169, 2
    %vm171 = vcmp.gt.s32.totalorder 0, %v170
    %v172 = vsel %vm171, 0, %v170
    %v173 = vsub.s32 32, %v172
    %v174 = vshll.u32 %v165, %v172
    %v175 = vshrl.u32 %v157, %v173
    %v176 = vor.u32 %v174, %v175
    %v177 = vsub.s32 4294967266, %v172
    %v178 = vadd.s32 %v177, 127
    %v179 = vshll.u32 %v178, 23
    %v180 = vor.u32 4788187, %v179
    %v181 = vand.u32 2147483647, %v180
    %v183 = vcvt.s32.f32 %v176
    %v184 = vmul.f32 %v183, %v181
    %v185 = vxor.u32 %v184, 2147483648
    %v186 = vsel %vm65, %v185, %v184
    %v187 = vsub.s32 4, %v163
    %v188 = vsel %vm65, %v187, %v163
    %v189 = vsel %vm64, %v62, %v186
    %v190 = vsel %vm64, 0, %v188
    %v191 = vmul.f32 %v189, %v189
    %v192 = vmul.f32 %v191, -0.001358992
    %v193 = vadd.f32 %v192, 0.041655596
    %v194 = vmul.f32 %v191, %v193
    %v195 = vadd.f32 %v194, -0.4999988
    %v196 = vmul.f32 %v191, %v195
    %v197 = vadd.f32 1.0, %v196
    %v198 = vmul.f32 %v189, %v189
    %v199 = vmul.f32 %v198, -0.00019511016
    %v200 = vadd.f32 %v199, 0.008332121
    %v201 = vmul.f32 %v198, %v200
    %v202 = vadd.f32 %v201, -0.16666654
    %v203 = vmul.f32 %v198, %v202
    %v204 = vadd.f32 %v203, 1.0
    %v205 = vmul.f32 %v204, %v189
    %vm206 = vweird.f32 %v62
    %v207 = vadd.s32 %v190, 3
    %v208 = vand.u32 %v207, 3
    %vm209 = vcmp.lt.s32.totalorder %v208, 2
    %vm210 = vcmp.eq.s32.totalorder %v208, 0
    %v211 = vxor.u32 %v205, 2147483648
    %v212 = vsel %vm210, %v197, %v211
    %vm213 = vcmp.eq.s32.totalorder %v208, 2
    %v214 = vxor.u32 %v197, 2147483648
    %v215 = vsel %vm213, %v214, %v205
    %v216 = vsel %vm209, %v212, %v215
    %v217 = vsel %vm206, nan, %v216
    %v218 = vmul.f32 %v60, %v217
    %v219 = vadd.f32 %v218, %v47
    %220 = vst [vmem:[#allocation7] sm:$0xff] %v219
    %v221 = vand.u32 2147483647, %v62
    %vm222 = vcmp.le.f32.partialorder %v221, 0.7853982
    %vm223 = vcmp.lt.s32.totalorder %v62, 0
    %v224 = vand.u32 %v62, 2139095040
    %v225 = vshrl.u32 %v224, 23
    %v226 = vsub.s32 %v225, 127
    %v227 = vand.u32 2147483647, %v62
    %v228 = vand.u32 %v227, 8388607
    %v229 = vor.u32 %v228, 8388608
    %v230 = vsub.s32 0, %v229
    %v231 = vadd.s32 %v226, 1
    %vm232 = vcmp.gt.s32.totalorder %v231, 0
    %v233 = vsel %vm232, %v231, 0
    %v234 = vshrl.u32 %v233, 5
    %v235 = vand.u32 %v233, 31
    %v236 = vsub.s32 32, %v235
    %v237 = vshrl.u32 683565275, %v236
    %v238 = vshll.u32 683565275, %v235
    %v239 = vshrl.u32 2475754826, %v236
    %v240 = vor.u32 %v238, %v239
    %v241 = vshll.u32 2475754826, %v235
    %v242 = vshrl.u32 2131351028, %v236
    %v243 = vor.u32 %v241, %v242
    %v244 = vshll.u32 2131351028, %v235
    %v245 = vshrl.u32 2102212464, %v236
    %v246 = vor.u32 %v244, %v245
    %v247 = vshll.u32 2102212464, %v235
    %v248 = vshrl.u32 920167782, %v236
    %v249 = vor.u32 %v247, %v248
    %v250 = vshll.u32 920167782, %v235
    %v251 = vshrl.u32 1326507024, %v236
    %v252 = vor.u32 %v250, %v251
    %vm253 = vcmp.lt.s32.totalorder %v234, 1
    %vm254 = vcmp.lt.s32.totalorder %v234, 2
    %vm255 = vcmp.lt.s32.totalorder %v234, 3
    %vm256 = vcmp.lt.s32.totalorder %v234, 4
    %v257 = vsel %vm253, %v237, %v240
    %v258 = vsel %vm256, %v246, 2102212464
    %v259 = vsel %vm255, %v243, %v258
    %v260 = vsel %vm254, %v257, %v259
    %v261 = vsel %vm253, %v240, %v243
    %v262 = vsel %vm256, %v249, 920167782
    %v263 = vsel %vm255, %v246, %v262
    %v264 = vsel %vm254, %v261, %v263
    %v265 = vsel %vm253, %v243, %v246
    %v266 = vsel %vm256, %v252, 1326507024
    %v267 = vsel %vm255, %v249, %v266
    %v268 = vsel %vm254, %v265, %v267
    %v269 = vshll.u32 %v229, 8
    %v270 = vand.u32 %v269, 65535
    %v271 = vshrl.u32 %v269, 16
    %v272 = vand.u32 %v268, 65535
    %v273 = vshrl.u32 %v268, 16
    %v274 = vmul.u32 %v270, %v272
    %v275 = vmul.u32 %v270, %v273
    %v276 = vmul.u32 %v271, %v272
    %v277 = vmul.u32 %v271, %v273
    %v278 = vshll.u32 %v275, 16
    %v279 = vshrl.u32 %v275, 16
    %v280 = vshll.u32 %v276, 16
    %v281 = vshrl.u32 %v276, 16
    %vm282 = vc.u32 %v274, %v278
    %v283 = vsel %vm282, 1, 0
    %v284 = vadd.s32 %v274, %v278
    %v285 = vadd.s32 %v277, %v283
    %vm286 = vc.u32 %v284, %v280
    %v287 = vsel %vm286, 1, 0
    %v288 = vadd.s32 %v284, %v280
    %v289 = vadd.s32 %v285, %v287
    %v290 = vadd.s32 %v289, %v279
    %v291 = vadd.s32 %v290, %v281
    %v292 = vand.u32 %v269, 65535
    %v293 = vshrl.u32 %v269, 16
    %v294 = vand.u32 %v264, 65535
    %v295 = vshrl.u32 %v264, 16
    %v296 = vmul.u32 %v292, %v294
    %v297 = vmul.u32 %v292, %v295
    %v298 = vmul.u32 %v293, %v294
    %v299 = vmul.u32 %v293, %v295
    %v300 = vshll.u32 %v297, 16
    %v301 = vshrl.u32 %v297, 16
    %v302 = vshll.u32 %v298, 16
    %v303 = vshrl.u32 %v298, 16
    %vm304 = vc.u32 %v296, %v300
    %v305 = vsel %vm304, 1, 0
    %v306 = vadd.s32 %v296, %v300
    %v307 = vadd.s32 %v299, %v305
    %vm308 = vc.u32 %v306, %v302
    %v309 = vsel %vm308, 1, 0
    %v310 = vadd.s32 %v306, %v302
    %v311 = vadd.s32 %v307, %v309
    %v312 = vadd.s32 %v311, %v301
    %v313 = vadd.s32 %v312, %v303
    %v314 = vmul.u32 %v269, %v260
    %v315 = vadd.s32 %v291, %v310
    %vm316 = vc.u32 %v291, %v310
    %v317 = vadd.s32 %v313, 1
    %v318 = vsel %vm316, %v317, %v313
    %v319 = vadd.s32 %v314, %v318
    %v320 = vadd.s32 %v319, 536870912
    %v321 = vshrl.u32 %v320, 30
    %v322 = vshll.u32 %v321, 30
    %v323 = vsub.s32 %v319, %v322
    %vm324 = vcmp.lt.s32.totalorder %v323, 0
    %v325 = vsub.s32 0, %v323
    %v326 = vsel %vm324, %v325, %v323
    %v327 = vclz %v326
    %v328 = vsub.s32 %v327, 2
    %vm329 = vcmp.gt.s32.totalorder 0, %v328
    %v330 = vsel %vm329, 0, %v328
    %v331 = vsub.s32 32, %v330
    %v332 = vshll.u32 %v323, %v330
    %v333 = vshrl.u32 %v315, %v331
    %v334 = vor.u32 %v332, %v333
    %v335 = vsub.s32 4294967266, %v330
    %v336 = vadd.s32 %v335, 127
    %v337 = vshll.u32 %v336, 23
    %v338 = vor.u32 4788187, %v337
    %v339 = vand.u32 2147483647, %v338
    %v341 = vcvt.s32.f32 %v334
    %v342 = vmul.f32 %v341, %v339
    %v343 = vxor.u32 %v342, 2147483648
    %v344 = vsel %vm223, %v343, %v342
    %v345 = vsub.s32 4, %v321
    %v346 = vsel %vm223, %v345, %v321
    %v347 = vsel %vm222, %v62, %v344
    %v348 = vsel %vm222, 0, %v346
    %v349 = vmul.f32 %v347, %v347
    %v350 = vmul.f32 %v349, -0.001358992
    %v351 = vadd.f32 %v350, 0.041655596
    %v352 = vmul.f32 %v349, %v351
    %v353 = vadd.f32 %v352, -0.4999988
    %v354 = vmul.f32 %v349, %v353
    %v355 = vadd.f32 1.0, %v354
    %v356 = vmul.f32 %v347, %v347
    %v357 = vmul.f32 %v356, -0.00019511016
    %v358 = vadd.f32 %v357, 0.008332121
    %v359 = vmul.f32 %v356, %v358
    %v360 = vadd.f32 %v359, -0.16666654
    %v361 = vmul.f32 %v356, %v360
    %v362 = vadd.f32 %v361, 1.0
    %v363 = vmul.f32 %v362, %v347
    %vm364 = vweird.f32 %v62
    %v365 = vand.u32 %v348, 3
    %vm366 = vcmp.lt.s32.totalorder %v365, 2
    %vm367 = vcmp.eq.s32.totalorder %v365, 0
    %v368 = vxor.u32 %v363, 2147483648
    %v369 = vsel %vm367, %v355, %v368
    %vm370 = vcmp.eq.s32.totalorder %v365, 2
    %v371 = vxor.u32 %v355, 2147483648
    %v372 = vsel %vm370, %v371, %v363
    %v373 = vsel %vm366, %v369, %v372
    %v374 = vsel %vm364, nan, %v373
    %v375 = vmul.f32 %v60, %v374
    %v376 = vadd.f32 %v375, %v49
    %s377 = scalar_lea.vmem [#allocation7], 8
    %378 = vst [vmem:[%s377] sm:$0xff] %v376
    // Predicated region
    $region18: #{tpu_custom_call.1} parent=1 // pred_check
      _
    $region19: #{tpu_custom_call.1} parent=1 // pred_check_branch
      %380 = sbr.rel (0) target = $region21
    $region20: #{tpu_custom_call.1} parent=1 // pred_region
      %382 = vsyncadd [#allocation4], 0
      %s383 = sshll.u32 [#allocation7], 4
      %s384 = int_to_ptr.vmem [resolvable:$true] %s383
      %s385 = sshll.u32 %s2, 4
      %s386 = int_to_ptr.hbm [resolvable:$true] %s385
      %391 = dma.vmem_to_hbm [thread:$0]  %s384, 256, %s386, [#allocation4], 128, 128, 8
    $region21: #{tpu_custom_call.1} parent=1 // pred_fallthru
      _
    // Predicated region
    $region22: #{tpu_custom_call.1} parent=1 // pred_check
      _
    $region23: #{tpu_custom_call.1} parent=1 // pred_check_branch
      %393 = sbr.rel (0) target = $region25
    $region24: #{tpu_custom_call.1} parent=1 // pred_region
      %395 = dma.done [#allocation4], 256
    $region25: #{tpu_custom_call.1} parent=1 // pred_fallthru
      _
    %396 = vsyncpa [#allocation3], 1
    %397 = vsyncpa [#allocation6], 1
    %398 = vsyncpa [#allocation4], 1

</llo_original>
